<compile_context>
chip_gen: v6e
topology: v6e:2x2x1
jax: 0.10.0
libtpu: 0.0.40
codegen_flags: <defaults>
</compile_context>

<pallas_src>
import jax
import jax.numpy as jnp
from jax import lax
from jax.experimental import pallas as pl
from jax.experimental.pallas import tpu as pltpu


def regression_net1_kernel(x_ref, w_ref, b_ref, o_ref):
    # x_ref: (TM, F)  batch tile
    # w_ref: (H, F)   VMEM-resident weight (torch layout, no wrapper transpose)
    # b_ref: (H, 1)   VMEM-resident bias
    # o_ref: (1, TM)  lane-dense output tile (batch along lanes)
    y = lax.dot_general(
        w_ref[...], x_ref[...],
        dimension_numbers=(((1,), (1,)), ((), ())),   # contract feature dims
        preferred_element_type=jnp.float32,
        precision=lax.Precision.HIGHEST,
    )                                                  # (H, TM)
    y = y + b_ref[...]                                 # bias broadcast over lanes
    o_ref[...] = jnp.max(y, axis=0, keepdims=True)     # max over hidden -> (1, TM)


def _round_up(n, m):
    return ((n + m - 1) // m) * m


def regression_net1_forward(x, weight, bias, *, tm_max=512):
    """x: (B, F) f32; weight: (H, F) torch Linear layout; bias: (H,) -> (B,)."""
    B, F = x.shape
    H = weight.shape[0]

    # Batch tile: multiple of 8; a multiple of 128 whenever more than one tile
    # is needed so the (1, TM) lane-dense output block stays legal & unmasked.
    if B <= tm_max:
        TM = _round_up(B, 8)
        B_pad = TM
    else:
        TM = tm_max                      # 512: multiple of 8 and 128
        B_pad = _round_up(B, TM)

    if B_pad != B:
        x = jnp.pad(x, ((0, B_pad - B), (0, 0)))   # zero-pad batch; sliced off below

    b2 = bias.reshape(H, 1).astype(jnp.float32)
    num_tiles = B_pad // TM

    out = pl.pallas_call(
        regression_net1_kernel,
        out_shape=jax.ShapeDtypeStruct((1, B_pad), jnp.float32),
        grid=(num_tiles,),
        in_specs=[
            pl.BlockSpec((TM, F), lambda i: (i, 0)),   # x streams by batch tile
            pl.BlockSpec((H, F), lambda i: (0, 0)),    # weight stays resident
            pl.BlockSpec((H, 1), lambda i: (0, 0)),    # bias stays resident
        ],
        out_specs=pl.BlockSpec((1, TM), lambda i: (0, i)),
        compiler_params=pltpu.CompilerParams(
            dimension_semantics=("parallel",),
        ),
    )(x.astype(jnp.float32), weight.astype(jnp.float32), b2)

    return out[0, :B]                                  # (B,)


def init_params(key, n_feature, n_hidden):
    # Mimic torch.nn.Linear default init: U(-k, k), k = 1/sqrt(in_features).
    k = 1.0 / jnp.sqrt(jnp.float32(n_feature))
    kw, kb = jax.random.split(key)
    weight = jax.random.uniform(kw, (n_hidden, n_feature), jnp.float32, -k, k)
    bias = jax.random.uniform(kb, (n_hidden,), jnp.float32, -k, k)
    return weight, bias


def _reference(x, weight, bias):
    y = jnp.dot(x, weight.T, precision=lax.Precision.HIGHEST) + bias
    return jnp.max(y, axis=1)


if __name__ == "__main__":
    key = jax.random.PRNGKey(0)
    kx, kp, kx2 = jax.random.split(key, 3)

    # Small shapes consistent with the module.
    batch, n_feature, n_hidden = 8, 16, 32
    x = jax.random.normal(kx, (batch, n_feature), jnp.float32)
    weight, bias = init_params(kp, n_feature, n_hidden)

    out = regression_net1_forward(x, weight, bias)
    out = jax.block_until_ready(out)
    ref = _reference(x, weight, bias)
    assert out.shape == (batch,)
    assert jnp.allclose(out, ref, atol=1e-5, rtol=1e-5)

    # Exercise the multi-tile / padded-batch path (grid > 1, resident weights).
    batch2 = 200
    x2 = jax.random.normal(kx2, (batch2, n_feature), jnp.float32)
    out2 = regression_net1_forward(x2, weight, bias, tm_max=128)
    out2 = jax.block_until_ready(out2)
    ref2 = _reference(x2, weight, bias)
    assert out2.shape == (batch2,)
    assert jnp.allclose(out2, ref2, atol=1e-5, rtol=1e-5)

    print("KERNEL_OK")
</pallas_src>

<mosaic_0001>
module attributes {stable_mosaic.version = 11 : i64} {
  func.func @regression_net1_kernel(%arg0: i32, %arg1: memref<8x16xf32, #tpu.memory_space<vmem>>, %arg2: memref<32x16xf32, #tpu.memory_space<vmem>>, %arg3: memref<32x1xf32, #tpu.memory_space<vmem>>, %arg4: memref<1x8xf32, #tpu.memory_space<vmem>>) attributes {dimension_semantics = [#tpu.dimension_semantics<parallel>], iteration_bounds = array<i64: 1>, scalar_prefetch = 0 : i64, scratch_operands = 0 : i64, tpu.core_type = #tpu.core_type<tc>, window_params = [{transform_indices = @transform_0, window_bounds = array<i64: 8, 16>}, {pipeline_mode = #tpu.pipeline_mode<synchronous>, transform_indices = @transform_1, window_bounds = array<i64: 32, 16>}, {pipeline_mode = #tpu.pipeline_mode<synchronous>, transform_indices = @transform_2, window_bounds = array<i64: 32, 1>}, {transform_indices = @transform_3, window_bounds = array<i64: 1, 8>}]} {
    %c0 = arith.constant 0 : index
    %c0_0 = arith.constant 0 : index
    %0 = vector.load %arg2[%c0, %c0_0] : memref<32x16xf32, #tpu.memory_space<vmem>>, vector<32x16xf32>
    %c0_1 = arith.constant 0 : index
    %c0_2 = arith.constant 0 : index
    %1 = vector.load %arg1[%c0_1, %c0_2] : memref<8x16xf32, #tpu.memory_space<vmem>>, vector<8x16xf32>
    %cst = arith.constant dense<0.000000e+00> : vector<32x8xf32>
    %2 = tpu.matmul %0, %1, %cst {dimension_numbers = #tpu.dot_dimension_numbers<[1], [1], [0], [0], [0, 0, 1, 0], [], []>, precision = #tpu.contract_precision<fp32>} : vector<32x16xf32>, vector<8x16xf32>, vector<32x8xf32> -> vector<32x8xf32>
    %c0_3 = arith.constant 0 : index
    %c0_4 = arith.constant 0 : index
    %3 = vector.load %arg3[%c0_3, %c0_4] : memref<32x1xf32, #tpu.memory_space<vmem>>, vector<32x1xf32>
    %4 = vector.broadcast %3 : vector<32x1xf32> to vector<32x8xf32>
    %5 = arith.addf %2, %4 : vector<32x8xf32>
    %cst_5 = arith.constant dense<0xFF800000> : vector<8xf32>
    %6 = vector.multi_reduction <maximumf>, %5, %cst_5 [0] : vector<32x8xf32> to vector<8xf32>
    %7 = vector.shape_cast %6 : vector<8xf32> to vector<1x8xf32>
    %c0_6 = arith.constant 0 : index
    %c0_7 = arith.constant 0 : index
    %8 = vector.load %arg4[%c0_6, %c0_7] : memref<1x8xf32, #tpu.memory_space<vmem>>, vector<1x8xf32>
    tpu.vector_store %arg4[%c0_6, %c0_7], %7 {strides = array<i32>} : memref<1x8xf32, #tpu.memory_space<vmem>>, vector<1x8xf32>,
    return
  }
  func.func @transform_0(%arg0: i32) -> (i32, i32) {
    %c0_i32 = arith.constant 0 : i32
    %c0_i32_0 = arith.constant 0 : i32
    return %arg0, %c0_i32 : i32, i32
  }
  func.func @transform_1(%arg0: i32) -> (i32, i32) {
    %c0_i32 = arith.constant 0 : i32
    %c0_i32_0 = arith.constant 0 : i32
    %c0_i32_1 = arith.constant 0 : i32
    return %c0_i32, %c0_i32_0 : i32, i32
  }
  func.func @transform_2(%arg0: i32) -> (i32, i32) {
    %c0_i32 = arith.constant 0 : i32
    %c0_i32_0 = arith.constant 0 : i32
    %c0_i32_1 = arith.constant 0 : i32
    return %c0_i32, %c0_i32_0 : i32, i32
  }
  func.func @transform_3(%arg0: i32) -> (i32, i32) {
    %c0_i32 = arith.constant 0 : i32
    %c0_i32_0 = arith.constant 0 : i32
    return %c0_i32, %arg0 : i32, i32
  }
}

</mosaic_0001>

<llo_original>
// kernel: tpu_custom_call.1
$region0: #{tpu_custom_call.1}
  #allocation0 [shape = 'u32[]', space=smem, size = 0x4, offset = 0x4, fixed_abs, tag = 'smem constant byte address 0x4 - core index']
  #allocation1 [shape = 'u32[144,128]{1,0:T(1,128)}', space=vmem, size = 0x12000, scoped, tag = 'internal scratch']
  %s0 = inlined_call_operand.vmem [shape: f32[8,16], index: 0, kind: input, shape index: {}]
  %s1 = inlined_call_operand.vmem [shape: f32[32,16], index: 1, kind: input, shape index: {}]
  %s2 = inlined_call_operand.vmem [shape: f32[32,1], index: 2, kind: input, shape index: {}]
  %s3 = inlined_call_operand.hbm [shape: f32[1,8], index: 3, kind: output, shape index: {}]
  %s4 = sld [smem:[#allocation0]]
  $region22: #{tpu_custom_call.1} parent=0
    _
  %s6 = ssub.s32 1, %s4
  %s7 = scalar_select 0, %s6, %s4
  $region1: #{tpu_custom_call.1} parent=0
    #allocation2 [shape = 'u8[512]{0}', space=vmem, size = 0x400, scoped, tag = 'output window, operand 0, single buffered']
    #allocation3 [shape = 's32[1]{0}', space=sflag, size = 0x4, scoped, tag = 'scoped memory for tpu_custom_call.1']
    %8 = vsyncpa [#allocation3], 0
    // Predicated region
    $region2: #{tpu_custom_call.1} parent=1 // pred_check
      _
    $region3: #{tpu_custom_call.1} parent=1 // pred_check_branch
      %10 = sbr.rel (0) target = $region5
    $region4: #{tpu_custom_call.1} parent=1 // pred_region
      _
    $region5: #{tpu_custom_call.1} parent=1 // pred_fallthru
      _
    // Predicated region
    $region6: #{tpu_custom_call.1} parent=1 // pred_check
      _
    $region7: #{tpu_custom_call.1} parent=1 // pred_check_branch
      %12 = sbr.rel (0) target = $region9
    $region8: #{tpu_custom_call.1} parent=1 // pred_region
      _
    $region9: #{tpu_custom_call.1} parent=1 // pred_fallthru
      _
    // Predicated region
    $region10: #{tpu_custom_call.1} parent=1 // pred_check
      _
    $region11: #{tpu_custom_call.1} parent=1 // pred_check_branch
      %14 = sbr.rel (0) target = $region13
    $region12: #{tpu_custom_call.1} parent=1 // pred_region
      _
    $region13: #{tpu_custom_call.1} parent=1 // pred_fallthru
      _
    %v15 = vld [vmem:[%s1] sm:$0xff]
    %v16 = vld [vmem:[%s1 + $0x8] sm:$0xff]
    %v17 = vld [vmem:[%s1 + $0x10] sm:$0xff]
    %v18 = vld [vmem:[%s1 + $0x18] sm:$0xff]
    %v19 = vld [vmem:[%s0] sm:$0xff]
    %v20 = vld [vmem:[%s2] sm:$0xff]
    %v21 = vld [vmem:[%s2 + $0x8] sm:$0xff]
    %v22 = vld [vmem:[%s2 + $0x10] sm:$0xff]
    %v23 = vld [vmem:[%s2 + $0x18] sm:$0xff]
    %25 = vset.pattern.permute.xlu0 0
    %26 = vperm.xlu0 %25, %v20
    %v27 = vpop.permute.xlu0 %26
    %30 = vset.pattern.permute.xlu0 0
    %31 = vperm.xlu0 %30, %v21
    %v32 = vpop.permute.xlu0 %31
    %35 = vset.pattern.permute.xlu0 0
    %36 = vperm.xlu0 %35, %v22
    %v37 = vpop.permute.xlu0 %36
    %40 = vset.pattern.permute.xlu0 0
    %41 = vperm.xlu0 %40, %v23
    %v42 = vpop.permute.xlu0 %41
    %vm44 = vcmask 130048
    %v46 = vsel %vm44, %v15, 0
    %v49 = vsel %vm44, %v16, 0
    %v52 = vsel %vm44, %v17, 0
    %v55 = vsel %vm44, %v18, 0
    %v58 = vsel %vm44, %v19, 0
    %60 = vmatprep.subr.mxu0 0.0
    %61 = vmatpush1.xpose.msra.mxu0 0.0
    %62 = vmatprep.subr.mxu0 0.0
    %63 = vmatpush1.xpose.msra.mxu0 0.0
    %64 = vmatprep.subr.mxu0 0.0
    %65 = vmatpush1.xpose.msra.mxu0 0.0
    %66 = vmatprep.subr.mxu0 0.0
    %67 = vmatpush1.xpose.msra.mxu0 0.0
    %68 = vmatprep.subr.mxu0 0.0
    %69 = vmatpush1.xpose.msra.mxu0 0.0
    %70 = vmatprep.subr.mxu0 0.0
    %71 = vmatpush1.xpose.msra.mxu0 0.0
    %72 = vmatprep.subr.mxu0 0.0
    %73 = vmatpush1.xpose.msra.mxu0 0.0
    %74 = vmatprep.subr.mxu0 0.0
    %75 = vmatpush1.xpose.msra.mxu0 0.0
    %76 = vmatprep.subr.mxu0 0.0
    %77 = vmatpush1.xpose.msra.mxu0 0.0
    %78 = vmatprep.subr.mxu0 0.0
    %79 = vmatpush1.xpose.msra.mxu0 0.0
    %80 = vmatprep.subr.mxu0 0.0
    %81 = vmatpush1.xpose.msra.mxu0 0.0
    %82 = vmatprep.subr.mxu0 0.0
    %83 = vmatpush1.xpose.msra.mxu0 0.0
    %84 = vmatprep.subr.mxu0 0.0
    %85 = vmatpush1.xpose.msra.mxu0 0.0
    %86 = vmatprep.subr.mxu0 0.0
    %87 = vmatpush1.xpose.msra.mxu0 0.0
    %88 = vmatprep.subr.mxu0 0.0
    %89 = vmatpush1.xpose.msra.mxu0 0.0
    %90 = vmatprep.subr.mxu0 0.0
    %v91 = vand.u32 %v58, 4294901760
    %92 = vmatpush1.xpose.msra.mxu0 %v91
    %93 = vmatprep.subr.mxu0 0.0
    %94 = vmatpush2.xpose.msra.mxu0 0.0
    %95 = vmatprep.subr.mxu0 0.0
    %96 = vmatpush2.xpose.msra.mxu0 0.0
    %97 = vmatprep.subr.mxu0 0.0
    %98 = vmatpush2.xpose.msra.mxu0 0.0
    %99 = vmatprep.subr.mxu0 0.0
    %100 = vmatpush2.xpose.msra.mxu0 0.0
    %101 = vmatprep.subr.mxu0 0.0
    %102 = vmatpush2.xpose.msra.mxu0 0.0
    %103 = vmatprep.subr.mxu0 0.0
    %104 = vmatpush2.xpose.msra.mxu0 0.0
    %105 = vmatprep.subr.mxu0 0.0
    %106 = vmatpush2.xpose.msra.mxu0 0.0
    %107 = vmatprep.subr.mxu0 0.0
    %108 = vmatpush2.xpose.msra.mxu0 0.0
    %109 = vmatprep.subr.mxu0 0.0
    %110 = vmatpush2.xpose.msra.mxu0 0.0
    %111 = vmatprep.subr.mxu0 0.0
    %112 = vmatpush2.xpose.msra.mxu0 0.0
    %113 = vmatprep.subr.mxu0 0.0
    %114 = vmatpush2.xpose.msra.mxu0 0.0
    %115 = vmatprep.subr.mxu0 0.0
    %116 = vmatpush2.xpose.msra.mxu0 0.0
    %117 = vmatprep.subr.mxu0 0.0
    %118 = vmatpush2.xpose.msra.mxu0 0.0
    %119 = vmatprep.subr.mxu0 0.0
    %120 = vmatpush2.xpose.msra.mxu0 0.0
    %121 = vmatprep.subr.mxu0 0.0
    %122 = vmatpush2.xpose.msra.mxu0 0.0
    %123 = vmatprep.subr.mxu0 0.0
    %124 = vmatpush2.xpose.msra.mxu0 0.0
    %125 = vmatprep.mubr.f32.mxu0 0.0
    %v126 = vand.u32 %v46, 4294901760
    %v127 = vsub.f32 %v46, %v126
    %v128 = vand.u32 %v127, 4294901760
    %v129 = vsub.f32 %v127, %v128
    %v130 = vand.u32 %v129, 4294901760
    %131 = vmatmul.mubr.f32.gmra.mxu0 %v130
    %v132 = vpop.f32.mrf.mxu0
    %v133 = vadd.f32 %v27, %v132
    %v134 = vpop.f32.mrf.mxu0
    %135 = vmatprep.mubr.f32.mxu0 0.0
    %v136 = vand.u32 %v49, 4294901760
    %v137 = vsub.f32 %v49, %v136
    %v138 = vand.u32 %v137, 4294901760
    %v139 = vsub.f32 %v137, %v138
    %v140 = vand.u32 %v139, 4294901760
    %141 = vmatmul.mubr.f32.gmra.mxu0 %v140
    %v142 = vpop.f32.mrf.mxu0
    %v143 = vadd.f32 %v32, %v142
    %v144 = vpop.f32.mrf.mxu0
    %145 = vmatprep.mubr.f32.mxu0 0.0
    %v146 = vand.u32 %v52, 4294901760
    %v147 = vsub.f32 %v52, %v146
    %v148 = vand.u32 %v147, 4294901760
    %v149 = vsub.f32 %v147, %v148
    %v150 = vand.u32 %v149, 4294901760
    %151 = vmatmul.mubr.f32.gmra.mxu0 %v150
    %v152 = vpop.f32.mrf.mxu0
    %v153 = vadd.f32 %v37, %v152
    %v154 = vpop.f32.mrf.mxu0
    %155 = vmatprep.mubr.f32.mxu0 0.0
    %v156 = vand.u32 %v55, 4294901760
    %v157 = vsub.f32 %v55, %v156
    %v158 = vand.u32 %v157, 4294901760
    %v159 = vsub.f32 %v157, %v158
    %v160 = vand.u32 %v159, 4294901760
    %161 = vmatmul.mubr.f32.gmra.mxu0 %v160
    %v162 = vpop.f32.mrf.mxu0
    %v163 = vadd.f32 %v42, %v162
    %v164 = vpop.f32.mrf.mxu0
    %165 = vdwg.mxu0
    %166 = vmatprep.subr.mxu0 0.0
    %167 = vmatpush1.xpose.msra.mxu0 0.0
    %168 = vmatprep.subr.mxu0 0.0
    %169 = vmatpush1.xpose.msra.mxu0 0.0
    %170 = vmatprep.subr.mxu0 0.0
    %171 = vmatpush1.xpose.msra.mxu0 0.0
    %172 = vmatprep.subr.mxu0 0.0
    %173 = vmatpush1.xpose.msra.mxu0 0.0
    %174 = vmatprep.subr.mxu0 0.0
    %175 = vmatpush1.xpose.msra.mxu0 0.0
    %176 = vmatprep.subr.mxu0 0.0
    %177 = vmatpush1.xpose.msra.mxu0 0.0
    %178 = vmatprep.subr.mxu0 0.0
    %179 = vmatpush1.xpose.msra.mxu0 0.0
    %180 = vmatprep.subr.mxu0 0.0
    %181 = vmatpush1.xpose.msra.mxu0 0.0
    %182 = vmatprep.subr.mxu0 0.0
    %183 = vmatpush1.xpose.msra.mxu0 0.0
    %184 = vmatprep.subr.mxu0 0.0
    %185 = vmatpush1.xpose.msra.mxu0 0.0
    %186 = vmatprep.subr.mxu0 0.0
    %187 = vmatpush1.xpose.msra.mxu0 0.0
    %188 = vmatprep.subr.mxu0 0.0
    %189 = vmatpush1.xpose.msra.mxu0 0.0
    %190 = vmatprep.subr.mxu0 0.0
    %191 = vmatpush1.xpose.msra.mxu0 0.0
    %192 = vmatprep.subr.mxu0 0.0
    %193 = vmatpush1.xpose.msra.mxu0 0.0
    %194 = vmatprep.subr.mxu0 0.0
    %195 = vmatpush1.xpose.msra.mxu0 0.0
    %196 = vmatprep.subr.mxu0 0.0
    %v197 = vand.u32 %v58, 4294901760
    %v198 = vsub.f32 %v58, %v197
    %v199 = vand.u32 %v198, 4294901760
    %v200 = vsub.f32 %v198, %v199
    %v201 = vand.u32 %v200, 4294901760
    %202 = vmatpush1.xpose.msra.mxu0 %v201
    %203 = vmatprep.subr.mxu0 0.0
    %204 = vmatpush2.xpose.msra.mxu0 0.0
    %205 = vmatprep.subr.mxu0 0.0
    %206 = vmatpush2.xpose.msra.mxu0 0.0
    %207 = vmatprep.subr.mxu0 0.0
    %208 = vmatpush2.xpose.msra.mxu0 0.0
    %209 = vmatprep.subr.mxu0 0.0
    %210 = vmatpush2.xpose.msra.mxu0 0.0
    %211 = vmatprep.subr.mxu0 0.0
    %212 = vmatpush2.xpose.msra.mxu0 0.0
    %213 = vmatprep.subr.mxu0 0.0
    %214 = vmatpush2.xpose.msra.mxu0 0.0
    %215 = vmatprep.subr.mxu0 0.0
    %216 = vmatpush2.xpose.msra.mxu0 0.0
    %217 = vmatprep.subr.mxu0 0.0
    %218 = vmatpush2.xpose.msra.mxu0 0.0
    %219 = vmatprep.subr.mxu0 0.0
    %220 = vmatpush2.xpose.msra.mxu0 0.0
    %221 = vmatprep.subr.mxu0 0.0
    %222 = vmatpush2.xpose.msra.mxu0 0.0
    %223 = vmatprep.subr.mxu0 0.0
    %224 = vmatpush2.xpose.msra.mxu0 0.0
    %225 = vmatprep.subr.mxu0 0.0
    %226 = vmatpush2.xpose.msra.mxu0 0.0
    %227 = vmatprep.subr.mxu0 0.0
    %228 = vmatpush2.xpose.msra.mxu0 0.0
    %229 = vmatprep.subr.mxu0 0.0
    %230 = vmatpush2.xpose.msra.mxu0 0.0
    %231 = vmatprep.subr.mxu0 0.0
    %232 = vmatpush2.xpose.msra.mxu0 0.0
    %233 = vmatprep.subr.mxu0 0.0
    %234 = vmatpush2.xpose.msra.mxu0 0.0
    %235 = vmatprep.mubr.f32.mxu0 0.0
    %v236 = vand.u32 %v46, 4294901760
    %237 = vmatmul.mubr.f32.gmra.mxu0 %v236
    %v238 = vpop.f32.mrf.mxu0
    %v239 = vadd.f32 %v133, %v238
    %v240 = vpop.f32.mrf.mxu0
    %241 = vmatprep.mubr.f32.mxu0 0.0
    %v242 = vand.u32 %v49, 4294901760
    %243 = vmatmul.mubr.f32.gmra.mxu0 %v242
    %v244 = vpop.f32.mrf.mxu0
    %v245 = vadd.f32 %v143, %v244
    %v246 = vpop.f32.mrf.mxu0
    %247 = vmatprep.mubr.f32.mxu0 0.0
    %v248 = vand.u32 %v52, 4294901760
    %249 = vmatmul.mubr.f32.gmra.mxu0 %v248
    %v250 = vpop.f32.mrf.mxu0
    %v251 = vadd.f32 %v153, %v250
    %v252 = vpop.f32.mrf.mxu0
    %253 = vmatprep.mubr.f32.mxu0 0.0
    %v254 = vand.u32 %v55, 4294901760
    %255 = vmatmul.mubr.f32.gmra.mxu0 %v254
    %v256 = vpop.f32.mrf.mxu0
    %v257 = vadd.f32 %v163, %v256
    %v258 = vpop.f32.mrf.mxu0
    %259 = vdwg.mxu0
    %260 = vmatprep.subr.mxu0 0.0
    %261 = vmatpush1.xpose.msra.mxu0 0.0
    %262 = vmatprep.subr.mxu0 0.0
    %263 = vmatpush1.xpose.msra.mxu0 0.0
    %264 = vmatprep.subr.mxu0 0.0
    %265 = vmatpush1.xpose.msra.mxu0 0.0
    %266 = vmatprep.subr.mxu0 0.0
    %267 = vmatpush1.xpose.msra.mxu0 0.0
    %268 = vmatprep.subr.mxu0 0.0
    %269 = vmatpush1.xpose.msra.mxu0 0.0
    %270 = vmatprep.subr.mxu0 0.0
    %271 = vmatpush1.xpose.msra.mxu0 0.0
    %272 = vmatprep.subr.mxu0 0.0
    %273 = vmatpush1.xpose.msra.mxu0 0.0
    %274 = vmatprep.subr.mxu0 0.0
    %275 = vmatpush1.xpose.msra.mxu0 0.0
    %276 = vmatprep.subr.mxu0 0.0
    %277 = vmatpush1.xpose.msra.mxu0 0.0
    %278 = vmatprep.subr.mxu0 0.0
    %279 = vmatpush1.xpose.msra.mxu0 0.0
    %280 = vmatprep.subr.mxu0 0.0
    %281 = vmatpush1.xpose.msra.mxu0 0.0
    %282 = vmatprep.subr.mxu0 0.0
    %283 = vmatpush1.xpose.msra.mxu0 0.0
    %284 = vmatprep.subr.mxu0 0.0
    %285 = vmatpush1.xpose.msra.mxu0 0.0
    %286 = vmatprep.subr.mxu0 0.0
    %287 = vmatpush1.xpose.msra.mxu0 0.0
    %288 = vmatprep.subr.mxu0 0.0
    %289 = vmatpush1.xpose.msra.mxu0 0.0
    %290 = vmatprep.subr.mxu0 0.0
    %v291 = vand.u32 %v58, 4294901760
    %v292 = vsub.f32 %v58, %v291
    %293 = vmatpush1.xpose.msra.mxu0 %v292
    %294 = vmatprep.subr.mxu0 0.0
    %295 = vmatpush2.xpose.msra.mxu0 0.0
    %296 = vmatprep.subr.mxu0 0.0
    %297 = vmatpush2.xpose.msra.mxu0 0.0
    %298 = vmatprep.subr.mxu0 0.0
    %299 = vmatpush2.xpose.msra.mxu0 0.0
    %300 = vmatprep.subr.mxu0 0.0
    %301 = vmatpush2.xpose.msra.mxu0 0.0
    %302 = vmatprep.subr.mxu0 0.0
    %303 = vmatpush2.xpose.msra.mxu0 0.0
    %304 = vmatprep.subr.mxu0 0.0
    %305 = vmatpush2.xpose.msra.mxu0 0.0
    %306 = vmatprep.subr.mxu0 0.0
    %307 = vmatpush2.xpose.msra.mxu0 0.0
    %308 = vmatprep.subr.mxu0 0.0
    %309 = vmatpush2.xpose.msra.mxu0 0.0
    %310 = vmatprep.subr.mxu0 0.0
    %311 = vmatpush2.xpose.msra.mxu0 0.0
    %312 = vmatprep.subr.mxu0 0.0
    %313 = vmatpush2.xpose.msra.mxu0 0.0
    %314 = vmatprep.subr.mxu0 0.0
    %315 = vmatpush2.xpose.msra.mxu0 0.0
    %316 = vmatprep.subr.mxu0 0.0
    %317 = vmatpush2.xpose.msra.mxu0 0.0
    %318 = vmatprep.subr.mxu0 0.0
    %319 = vmatpush2.xpose.msra.mxu0 0.0
    %320 = vmatprep.subr.mxu0 0.0
    %321 = vmatpush2.xpose.msra.mxu0 0.0
    %322 = vmatprep.subr.mxu0 0.0
    %323 = vmatpush2.xpose.msra.mxu0 0.0
    %324 = vmatprep.subr.mxu0 0.0
    %325 = vmatpush2.xpose.msra.mxu0 0.0
    %326 = vmatprep.mubr.f32.mxu0 0.0
    %v327 = vand.u32 %v46, 4294901760
    %v328 = vsub.f32 %v46, %v327
    %329 = vmatmul.mubr.f32.gmra.mxu0 %v328
    %v330 = vpop.f32.mrf.mxu0
    %v331 = vadd.f32 %v239, %v330
    %v332 = vpop.f32.mrf.mxu0
    %333 = vmatprep.mubr.f32.mxu0 0.0
    %v334 = vand.u32 %v49, 4294901760
    %v335 = vsub.f32 %v49, %v334
    %336 = vmatmul.mubr.f32.gmra.mxu0 %v335
    %v337 = vpop.f32.mrf.mxu0
    %v338 = vadd.f32 %v245, %v337
    %v339 = vpop.f32.mrf.mxu0
    %340 = vmatprep.mubr.f32.mxu0 0.0
    %v341 = vand.u32 %v52, 4294901760
    %v342 = vsub.f32 %v52, %v341
    %343 = vmatmul.mubr.f32.gmra.mxu0 %v342
    %v344 = vpop.f32.mrf.mxu0
    %v345 = vadd.f32 %v251, %v344
    %v346 = vpop.f32.mrf.mxu0
    %347 = vmatprep.mubr.f32.mxu0 0.0
    %v348 = vand.u32 %v55, 4294901760
    %v349 = vsub.f32 %v55, %v348
    %350 = vmatmul.mubr.f32.gmra.mxu0 %v349
    %v351 = vpop.f32.mrf.mxu0
    %v352 = vadd.f32 %v257, %v351
    %v353 = vpop.f32.mrf.mxu0
    %354 = vdwg.mxu0
    %355 = vmatprep.subr.mxu0 0.0
    %356 = vmatpush1.xpose.msra.mxu0 0.0
    %357 = vmatprep.subr.mxu0 0.0
    %358 = vmatpush1.xpose.msra.mxu0 0.0
    %359 = vmatprep.subr.mxu0 0.0
    %360 = vmatpush1.xpose.msra.mxu0 0.0
    %361 = vmatprep.subr.mxu0 0.0
    %362 = vmatpush1.xpose.msra.mxu0 0.0
    %363 = vmatprep.subr.mxu0 0.0
    %364 = vmatpush1.xpose.msra.mxu0 0.0
    %365 = vmatprep.subr.mxu0 0.0
    %366 = vmatpush1.xpose.msra.mxu0 0.0
    %367 = vmatprep.subr.mxu0 0.0
    %368 = vmatpush1.xpose.msra.mxu0 0.0
    %369 = vmatprep.subr.mxu0 0.0
    %370 = vmatpush1.xpose.msra.mxu0 0.0
    %371 = vmatprep.subr.mxu0 0.0
    %372 = vmatpush1.xpose.msra.mxu0 0.0
    %373 = vmatprep.subr.mxu0 0.0
    %374 = vmatpush1.xpose.msra.mxu0 0.0
    %375 = vmatprep.subr.mxu0 0.0
    %376 = vmatpush1.xpose.msra.mxu0 0.0
    %377 = vmatprep.subr.mxu0 0.0
    %378 = vmatpush1.xpose.msra.mxu0 0.0
    %379 = vmatprep.subr.mxu0 0.0
    %380 = vmatpush1.xpose.msra.mxu0 0.0
    %381 = vmatprep.subr.mxu0 0.0
    %382 = vmatpush1.xpose.msra.mxu0 0.0
    %383 = vmatprep.subr.mxu0 0.0
    %384 = vmatpush1.xpose.msra.mxu0 0.0
    %385 = vmatprep.subr.mxu0 0.0
    %v386 = vand.u32 %v58, 4294901760
    %387 = vmatpush1.xpose.msra.mxu0 %v386
    %388 = vmatprep.subr.mxu0 0.0
    %389 = vmatpush2.xpose.msra.mxu0 0.0
    %390 = vmatprep.subr.mxu0 0.0
    %391 = vmatpush2.xpose.msra.mxu0 0.0
    %392 = vmatprep.subr.mxu0 0.0
    %393 = vmatpush2.xpose.msra.mxu0 0.0
    %394 = vmatprep.subr.mxu0 0.0
    %395 = vmatpush2.xpose.msra.mxu0 0.0
    %396 = vmatprep.subr.mxu0 0.0
    %397 = vmatpush2.xpose.msra.mxu0 0.0
    %398 = vmatprep.subr.mxu0 0.0
    %399 = vmatpush2.xpose.msra.mxu0 0.0
    %400 = vmatprep.subr.mxu0 0.0
    %401 = vmatpush2.xpose.msra.mxu0 0.0
    %402 = vmatprep.subr.mxu0 0.0
    %403 = vmatpush2.xpose.msra.mxu0 0.0
    %404 = vmatprep.subr.mxu0 0.0
    %405 = vmatpush2.xpose.msra.mxu0 0.0
    %406 = vmatprep.subr.mxu0 0.0
    %407 = vmatpush2.xpose.msra.mxu0 0.0
    %408 = vmatprep.subr.mxu0 0.0
    %409 = vmatpush2.xpose.msra.mxu0 0.0
    %410 = vmatprep.subr.mxu0 0.0
    %411 = vmatpush2.xpose.msra.mxu0 0.0
    %412 = vmatprep.subr.mxu0 0.0
    %413 = vmatpush2.xpose.msra.mxu0 0.0
    %414 = vmatprep.subr.mxu0 0.0
    %415 = vmatpush2.xpose.msra.mxu0 0.0
    %416 = vmatprep.subr.mxu0 0.0
    %417 = vmatpush2.xpose.msra.mxu0 0.0
    %418 = vmatprep.subr.mxu0 0.0
    %419 = vmatpush2.xpose.msra.mxu0 0.0
    %420 = vmatprep.mubr.f32.mxu0 0.0
    %v421 = vand.u32 %v46, 4294901760
    %v422 = vsub.f32 %v46, %v421
    %v423 = vand.u32 %v422, 4294901760
    %424 = vmatmul.mubr.f32.gmra.mxu0 %v423
    %v425 = vpop.f32.mrf.mxu0
    %v426 = vadd.f32 %v331, %v425
    %v427 = vpop.f32.mrf.mxu0
    %428 = vmatprep.mubr.f32.mxu0 0.0
    %v429 = vand.u32 %v49, 4294901760
    %v430 = vsub.f32 %v49, %v429
    %v431 = vand.u32 %v430, 4294901760
    %432 = vmatmul.mubr.f32.gmra.mxu0 %v431
    %v433 = vpop.f32.mrf.mxu0
    %v434 = vadd.f32 %v338, %v433
    %v435 = vpop.f32.mrf.mxu0
    %436 = vmatprep.mubr.f32.mxu0 0.0
    %v437 = vand.u32 %v52, 4294901760
    %v438 = vsub.f32 %v52, %v437
    %v439 = vand.u32 %v438, 4294901760
    %440 = vmatmul.mubr.f32.gmra.mxu0 %v439
    %v441 = vpop.f32.mrf.mxu0
    %v442 = vadd.f32 %v345, %v441
    %v443 = vpop.f32.mrf.mxu0
    %444 = vmatprep.mubr.f32.mxu0 0.0
    %v445 = vand.u32 %v55, 4294901760
    %v446 = vsub.f32 %v55, %v445
    %v447 = vand.u32 %v446, 4294901760
    %448 = vmatmul.mubr.f32.gmra.mxu0 %v447
    %v449 = vpop.f32.mrf.mxu0
    %v450 = vadd.f32 %v352, %v449
    %v451 = vpop.f32.mrf.mxu0
    %452 = vdwg.mxu0
    %453 = vmatprep.subr.mxu0 0.0
    %454 = vmatpush1.xpose.msra.mxu0 0.0
    %455 = vmatprep.subr.mxu0 0.0
    %456 = vmatpush1.xpose.msra.mxu0 0.0
    %457 = vmatprep.subr.mxu0 0.0
    %458 = vmatpush1.xpose.msra.mxu0 0.0
    %459 = vmatprep.subr.mxu0 0.0
    %460 = vmatpush1.xpose.msra.mxu0 0.0
    %461 = vmatprep.subr.mxu0 0.0
    %462 = vmatpush1.xpose.msra.mxu0 0.0
    %463 = vmatprep.subr.mxu0 0.0
    %464 = vmatpush1.xpose.msra.mxu0 0.0
    %465 = vmatprep.subr.mxu0 0.0
    %466 = vmatpush1.xpose.msra.mxu0 0.0
    %467 = vmatprep.subr.mxu0 0.0
    %468 = vmatpush1.xpose.msra.mxu0 0.0
    %469 = vmatprep.subr.mxu0 0.0
    %470 = vmatpush1.xpose.msra.mxu0 0.0
    %471 = vmatprep.subr.mxu0 0.0
    %472 = vmatpush1.xpose.msra.mxu0 0.0
    %473 = vmatprep.subr.mxu0 0.0
    %474 = vmatpush1.xpose.msra.mxu0 0.0
    %475 = vmatprep.subr.mxu0 0.0
    %476 = vmatpush1.xpose.msra.mxu0 0.0
    %477 = vmatprep.subr.mxu0 0.0
    %478 = vmatpush1.xpose.msra.mxu0 0.0
    %479 = vmatprep.subr.mxu0 0.0
    %480 = vmatpush1.xpose.msra.mxu0 0.0
    %481 = vmatprep.subr.mxu0 0.0
    %482 = vmatpush1.xpose.msra.mxu0 0.0
    %483 = vmatprep.subr.mxu0 0.0
    %v484 = vand.u32 %v58, 4294901760
    %v485 = vsub.f32 %v58, %v484
    %v486 = vand.u32 %v485, 4294901760
    %487 = vmatpush1.xpose.msra.mxu0 %v486
    %488 = vmatprep.subr.mxu0 0.0
    %489 = vmatpush2.xpose.msra.mxu0 0.0
    %490 = vmatprep.subr.mxu0 0.0
    %491 = vmatpush2.xpose.msra.mxu0 0.0
    %492 = vmatprep.subr.mxu0 0.0
    %493 = vmatpush2.xpose.msra.mxu0 0.0
    %494 = vmatprep.subr.mxu0 0.0
    %495 = vmatpush2.xpose.msra.mxu0 0.0
    %496 = vmatprep.subr.mxu0 0.0
    %497 = vmatpush2.xpose.msra.mxu0 0.0
    %498 = vmatprep.subr.mxu0 0.0
    %499 = vmatpush2.xpose.msra.mxu0 0.0
    %500 = vmatprep.subr.mxu0 0.0
    %501 = vmatpush2.xpose.msra.mxu0 0.0
    %502 = vmatprep.subr.mxu0 0.0
    %503 = vmatpush2.xpose.msra.mxu0 0.0
    %504 = vmatprep.subr.mxu0 0.0
    %505 = vmatpush2.xpose.msra.mxu0 0.0
    %506 = vmatprep.subr.mxu0 0.0
    %507 = vmatpush2.xpose.msra.mxu0 0.0
    %508 = vmatprep.subr.mxu0 0.0
    %509 = vmatpush2.xpose.msra.mxu0 0.0
    %510 = vmatprep.subr.mxu0 0.0
    %511 = vmatpush2.xpose.msra.mxu0 0.0
    %512 = vmatprep.subr.mxu0 0.0
    %513 = vmatpush2.xpose.msra.mxu0 0.0
    %514 = vmatprep.subr.mxu0 0.0
    %515 = vmatpush2.xpose.msra.mxu0 0.0
    %516 = vmatprep.subr.mxu0 0.0
    %517 = vmatpush2.xpose.msra.mxu0 0.0
    %518 = vmatprep.subr.mxu0 0.0
    %519 = vmatpush2.xpose.msra.mxu0 0.0
    %520 = vmatprep.mubr.f32.mxu0 0.0
    %v521 = vand.u32 %v46, 4294901760
    %522 = vmatmul.mubr.f32.gmra.mxu0 %v521
    %v523 = vpop.f32.mrf.mxu0
    %v524 = vadd.f32 %v426, %v523
    %v525 = vpop.f32.mrf.mxu0
    %526 = vmatprep.mubr.f32.mxu0 0.0
    %v527 = vand.u32 %v49, 4294901760
    %528 = vmatmul.mubr.f32.gmra.mxu0 %v527
    %v529 = vpop.f32.mrf.mxu0
    %v530 = vadd.f32 %v434, %v529
    %v531 = vpop.f32.mrf.mxu0
    %532 = vmatprep.mubr.f32.mxu0 0.0
    %v533 = vand.u32 %v52, 4294901760
    %534 = vmatmul.mubr.f32.gmra.mxu0 %v533
    %v535 = vpop.f32.mrf.mxu0
    %v536 = vadd.f32 %v442, %v535
    %v537 = vpop.f32.mrf.mxu0
    %538 = vmatprep.mubr.f32.mxu0 0.0
    %v539 = vand.u32 %v55, 4294901760
    %540 = vmatmul.mubr.f32.gmra.mxu0 %v539
    %v541 = vpop.f32.mrf.mxu0
    %v542 = vadd.f32 %v450, %v541
    %v543 = vpop.f32.mrf.mxu0
    %544 = vdwg.mxu0
    %545 = vmatprep.subr.mxu0 0.0
    %546 = vmatpush1.xpose.msra.mxu0 0.0
    %547 = vmatprep.subr.mxu0 0.0
    %548 = vmatpush1.xpose.msra.mxu0 0.0
    %549 = vmatprep.subr.mxu0 0.0
    %550 = vmatpush1.xpose.msra.mxu0 0.0
    %551 = vmatprep.subr.mxu0 0.0
    %552 = vmatpush1.xpose.msra.mxu0 0.0
    %553 = vmatprep.subr.mxu0 0.0
    %554 = vmatpush1.xpose.msra.mxu0 0.0
    %555 = vmatprep.subr.mxu0 0.0
    %556 = vmatpush1.xpose.msra.mxu0 0.0
    %557 = vmatprep.subr.mxu0 0.0
    %558 = vmatpush1.xpose.msra.mxu0 0.0
    %559 = vmatprep.subr.mxu0 0.0
    %560 = vmatpush1.xpose.msra.mxu0 0.0
    %561 = vmatprep.subr.mxu0 0.0
    %562 = vmatpush1.xpose.msra.mxu0 0.0
    %563 = vmatprep.subr.mxu0 0.0
    %564 = vmatpush1.xpose.msra.mxu0 0.0
    %565 = vmatprep.subr.mxu0 0.0
    %566 = vmatpush1.xpose.msra.mxu0 0.0
    %567 = vmatprep.subr.mxu0 0.0
    %568 = vmatpush1.xpose.msra.mxu0 0.0
    %569 = vmatprep.subr.mxu0 0.0
    %570 = vmatpush1.xpose.msra.mxu0 0.0
    %571 = vmatprep.subr.mxu0 0.0
    %572 = vmatpush1.xpose.msra.mxu0 0.0
    %573 = vmatprep.subr.mxu0 0.0
    %574 = vmatpush1.xpose.msra.mxu0 0.0
    %575 = vmatprep.subr.mxu0 0.0
    %v576 = vand.u32 %v58, 4294901760
    %577 = vmatpush1.xpose.msra.mxu0 %v576
    %578 = vmatprep.subr.mxu0 0.0
    %579 = vmatpush2.xpose.msra.mxu0 0.0
    %580 = vmatprep.subr.mxu0 0.0
    %581 = vmatpush2.xpose.msra.mxu0 0.0
    %582 = vmatprep.subr.mxu0 0.0
    %583 = vmatpush2.xpose.msra.mxu0 0.0
    %584 = vmatprep.subr.mxu0 0.0
    %585 = vmatpush2.xpose.msra.mxu0 0.0
    %586 = vmatprep.subr.mxu0 0.0
    %587 = vmatpush2.xpose.msra.mxu0 0.0
    %588 = vmatprep.subr.mxu0 0.0
    %589 = vmatpush2.xpose.msra.mxu0 0.0
    %590 = vmatprep.subr.mxu0 0.0
    %591 = vmatpush2.xpose.msra.mxu0 0.0
    %592 = vmatprep.subr.mxu0 0.0
    %593 = vmatpush2.xpose.msra.mxu0 0.0
    %594 = vmatprep.subr.mxu0 0.0
    %595 = vmatpush2.xpose.msra.mxu0 0.0
    %596 = vmatprep.subr.mxu0 0.0
    %597 = vmatpush2.xpose.msra.mxu0 0.0
    %598 = vmatprep.subr.mxu0 0.0
    %599 = vmatpush2.xpose.msra.mxu0 0.0
    %600 = vmatprep.subr.mxu0 0.0
    %601 = vmatpush2.xpose.msra.mxu0 0.0
    %602 = vmatprep.subr.mxu0 0.0
    %603 = vmatpush2.xpose.msra.mxu0 0.0
    %604 = vmatprep.subr.mxu0 0.0
    %605 = vmatpush2.xpose.msra.mxu0 0.0
    %606 = vmatprep.subr.mxu0 0.0
    %607 = vmatpush2.xpose.msra.mxu0 0.0
    %608 = vmatprep.subr.mxu0 0.0
    %609 = vmatpush2.xpose.msra.mxu0 0.0
    %610 = vmatprep.mubr.f32.mxu0 0.0
    %v611 = vand.u32 %v46, 4294901760
    %612 = vmatmul.mubr.f32.gmra.mxu0 %v611
    %v613 = vpop.f32.mrf.mxu0
    %v614 = vadd.f32 %v524, %v613
    %v615 = vpop.f32.mrf.mxu0
    %616 = vmatprep.mubr.f32.mxu0 0.0
    %v617 = vand.u32 %v49, 4294901760
    %618 = vmatmul.mubr.f32.gmra.mxu0 %v617
    %v619 = vpop.f32.mrf.mxu0
    %v620 = vadd.f32 %v530, %v619
    %v621 = vpop.f32.mrf.mxu0
    %622 = vmatprep.mubr.f32.mxu0 0.0
    %v623 = vand.u32 %v52, 4294901760
    %624 = vmatmul.mubr.f32.gmra.mxu0 %v623
    %v625 = vpop.f32.mrf.mxu0
    %v626 = vadd.f32 %v536, %v625
    %v627 = vpop.f32.mrf.mxu0
    %628 = vmatprep.mubr.f32.mxu0 0.0
    %v629 = vand.u32 %v55, 4294901760
    %630 = vmatmul.mubr.f32.gmra.mxu0 %v629
    %v631 = vpop.f32.mrf.mxu0
    %v632 = vadd.f32 %v542, %v631
    %v633 = vpop.f32.mrf.mxu0
    %634 = vdwg.mxu0
    %vm635 = vcmask 64512
    %v636 = vsel %vm635, %v614, -inf
    %v637 = vsel %vm635, %v620, -inf
    %v638 = vsel %vm635, %v626, -inf
    %v639 = vsel %vm635, %v632, -inf
    %v640 = vmax.f32 %v636, %v637
    %v641 = vmax.f32 %v638, %v639
    %v642 = vmax.f32 %v640, %v641
    %v643 = vrot.slane %v642, 4
    %v644 = vmax.f32 %v642, %v643
    %v645 = vrot.slane %v644, 2
    %v646 = vmax.f32 %v644, %v645
    %v647 = vrot.slane %v646, 1
    %v648 = vmax.f32 %v646, %v647
    %vm649 = vcmask 57344
    %650 = vst.msk [vmem:[#allocation2] sm:$0x1] %vm649, %v648
    // Predicated region
    $region14: #{tpu_custom_call.1} parent=1 // pred_check
      _
    $region15: #{tpu_custom_call.1} parent=1 // pred_check_branch
      %652 = sbr.rel (0) target = $region17
    $region16: #{tpu_custom_call.1} parent=1 // pred_region
      %s654 = ssub.s32 16, 16
      %655 = vsyncadd [#allocation3], %s654
      %s657 = sshll.u32 [#allocation2], 4
      %s658 = int_to_ptr.vmem [resolvable:$true] %s657
      %660 = dma.vmem_to_hbm [thread:$0]  %s658, 16, %s3, [#allocation3]
    $region17: #{tpu_custom_call.1} parent=1 // pred_fallthru
      _
    // Predicated region
    $region18: #{tpu_custom_call.1} parent=1 // pred_check
      _
    $region19: #{tpu_custom_call.1} parent=1 // pred_check_branch
      %662 = sbr.rel (0) target = $region21
    $region20: #{tpu_custom_call.1} parent=1 // pred_region
      %663 = dma.done [#allocation3], 16
    $region21: #{tpu_custom_call.1} parent=1 // pred_fallthru
      _
    %664 = vsyncpa [#allocation3], 1

</llo_original>
